<compile_context>
chip_gen: v7x
topology: tpu7x:2x2x1
jax: 0.10.0
libtpu: 0.0.40
codegen_flags: <defaults>
</compile_context>

<pallas_src>
import jax
import jax.numpy as jnp
from jax.experimental import pallas as pl
from jax.experimental.pallas import tpu as pltpu

_LANE = 128   # TPU lane width: pair-block size and padding granularity


def _round_up(x, m):
    return ((x + m - 1) // m) * m


def _vmem_capacity_bytes():
    """Per-TensorCore VMEM capacity (64 MiB on v7x, 128 MiB on v5e/v6e)."""
    try:
        cap = int(pltpu.get_tpu_info().vmem_capacity_bytes)
        if cap > 0:
            return cap
    except Exception:
        pass
    return 64 * 1024 * 1024   # conservative default (v7x per-core VMEM)


# ----------------------------------------------------------------------------
# Fast path: table resident in VMEM, rows gathered via one-hot MXU matmul.
# ----------------------------------------------------------------------------
def _resident_table_kernel(sidx_ref, didx_ref, table_ref, out_ref):
    # sidx_ref / didx_ref : VMEM (TB, 1) int32   pair indices for this block
    # table_ref           : VMEM (C_pad, D_pad)  full table (constant index_map
    #                        -> fetched from HBM once per call, stays resident)
    # out_ref             : VMEM (TB, 1) float32
    tb = out_ref.shape[0]
    c_pad = table_ref.shape[0]
    table = table_ref[...]                                         # (C_pad, D_pad)

    # Row gather as a one-hot matmul: only iota/compare/MXU ops (no in-kernel
    # dynamic gather).  One-hot row j has a single 1.0 at column idx[j], so the
    # gathered rows are exact copies of the table rows.
    cls = jax.lax.broadcasted_iota(jnp.int32, (tb, c_pad), 1)       # (TB, C_pad)
    oh_src = jnp.where(cls == sidx_ref[...], 1.0, 0.0).astype(table.dtype)
    oh_dst = jnp.where(cls == didx_ref[...], 1.0, 0.0).astype(table.dtype)
    src = jnp.dot(oh_src, table, preferred_element_type=jnp.float32)   # (TB, D_pad) f32
    dst = jnp.dot(oh_dst, table, preferred_element_type=jnp.float32)

    s = jnp.sum(src * dst, axis=-1, keepdims=True)                  # (TB, 1)  VPU + XLU
    out_ref[...] = jax.nn.sigmoid(-s)                               # == 1 - sigmoid(s); EUP


# ----------------------------------------------------------------------------
# Fallback path: table in HBM, per-block manual DMA row gather into VMEM.
# ----------------------------------------------------------------------------
def _hbm_gather_kernel(sidx_ref, didx_ref, table_hbm, out_ref,
                       src_buf, dst_buf, sem):
    # sidx_ref / didx_ref : SMEM (B_pad,) int32 scalar-prefetched pair indices
    # table_hbm           : HBM  (C_pad, D_pad) ref (memory_space=pl.ANY)
    # out_ref             : VMEM (TB, 1) float32
    # src_buf / dst_buf   : VMEM (TB, D_pad) scratch (table dtype)
    # sem                 : DMA semaphores, shape (2,)  [src copies | dst copies]
    tb = src_buf.shape[0]
    base = pl.program_id(0) * tb

    # Issue all 2*TB row-gather DMAs up front so their latencies overlap, then
    # drain.  (Cross-block double buffering would add further overlap, but the
    # copies within a block are already all in flight together.)
    @pl.loop(0, tb)
    def _issue(j):
        si = sidx_ref[base + j]
        di = didx_ref[base + j]
        pltpu.make_async_copy(table_hbm.at[pl.ds(si, 1), :],
                              src_buf.at[pl.ds(j, 1), :], sem.at[0]).start()
        pltpu.make_async_copy(table_hbm.at[pl.ds(di, 1), :],
                              dst_buf.at[pl.ds(j, 1), :], sem.at[1]).start()

    @pl.loop(0, tb)
    def _drain(j):
        # Wait descriptors only need the matching transfer size + semaphore.
        pltpu.make_async_copy(table_hbm.at[pl.ds(0, 1), :],
                              src_buf.at[pl.ds(0, 1), :], sem.at[0]).wait()
        pltpu.make_async_copy(table_hbm.at[pl.ds(0, 1), :],
                              dst_buf.at[pl.ds(0, 1), :], sem.at[1]).wait()

    src = src_buf[...].astype(jnp.float32)                          # f32 upcast (v5e-safe)
    dst = dst_buf[...].astype(jnp.float32)
    s = jnp.sum(src * dst, axis=-1, keepdims=True)                  # (TB, 1)
    out_ref[...] = jax.nn.sigmoid(-s)


# ----------------------------------------------------------------------------
# Factory
# ----------------------------------------------------------------------------
def make_cosine_similarity(class_embeddings,
                           table_dtype=jnp.float32,
                           pair_block=128,
                           force_hbm_gather=False):
    """Builds JAX/Pallas forward fns for the mowl CosineSimilarity module.

    table_dtype=jnp.bfloat16 is strongly recommended for large tables: it
    halves gather traffic and the resident-table VMEM footprint (doubling what
    fits in v7x's 64 MiB VMEM).  Rows are consumed at f32, so only the bf16
    rounding of the stored weights changes numerics; default f32 matches torch.
    """
    names = list(class_embeddings.keys())
    class_index_dict = {k: i for i, k in enumerate(names)}
    vals = jnp.asarray([class_embeddings[k] for k in names], dtype=jnp.float32)
    num_classes, emb_size = vals.shape

    tb = max(_LANE, _round_up(int(pair_block), _LANE))     # pairs per grid step
    c_pad = _round_up(num_classes, _LANE)                  # MXU-friendly contraction dim
    d_pad = _round_up(emb_size, _LANE)                     # lane-aligned rows
    table = jnp.zeros((c_pad, d_pad), dtype=table_dtype)
    table = table.at[:num_classes, :emb_size].set(vals.astype(table_dtype))
    itemsize = jnp.dtype(table_dtype).itemsize

    # ---- path selection: VMEM-resident table vs HBM row gather --------------
    capacity = _vmem_capacity_bytes()
    resident_footprint = (
        2 * c_pad * d_pad * itemsize        # table block (allow double buffering)
        + 2 * tb * c_pad * 4                # one-hot intermediates (f32 upper bound)
        + 4 * tb * d_pad * 4                # gathered rows + products (f32)
        + (2 << 20))                        # index/output blocks + slack
    use_resident = ((not force_hbm_gather)
                    and resident_footprint <= capacity // 2
                    and c_pad <= 16384)     # keep the one-hot gather matmul cheap
    vmem_limit = None
    if use_resident and resident_footprint > (24 << 20):
        vmem_limit = int(min(int(0.9 * capacity), resident_footprint + (8 << 20)))

    _call_cache = {}

    def _resident_call(b_pad):
        nb = b_pad // tb
        return pl.pallas_call(
            _resident_table_kernel,
            out_shape=jax.ShapeDtypeStruct((b_pad, 1), jnp.float32),
            grid_spec=pltpu.PrefetchScalarGridSpec(
                num_scalar_prefetch=0,
                grid=(nb,),
                in_specs=[
                    pl.BlockSpec((tb, 1), lambda b: (b, 0)),         # src idx block
                    pl.BlockSpec((tb, 1), lambda b: (b, 0)),         # dst idx block
                    pl.BlockSpec((c_pad, d_pad), lambda b: (0, 0)),  # resident table
                ],
                out_specs=pl.BlockSpec((tb, 1), lambda b: (b, 0)),
            ),
            compiler_params=pltpu.CompilerParams(
                dimension_semantics=("parallel",),   # >=2 blocks shard over v7x's 2 TCs
                vmem_limit_bytes=vmem_limit),
        )

    def _hbm_call(b_pad):
        nb = b_pad // tb
        return pl.pallas_call(
            _hbm_gather_kernel,
            out_shape=jax.ShapeDtypeStruct((b_pad, 1), jnp.float32),
            grid_spec=pltpu.PrefetchScalarGridSpec(
                num_scalar_prefetch=2,               # src/dst index arrays -> SMEM
                grid=(nb,),
                in_specs=[pl.BlockSpec(memory_space=pl.ANY)],  # table stays in HBM
                out_specs=pl.BlockSpec((tb, 1), lambda b, sidx, didx: (b, 0)),
                scratch_shapes=[
                    pltpu.VMEM((tb, d_pad), table_dtype),
                    pltpu.VMEM((tb, d_pad), table_dtype),
                    pltpu.SemaphoreType.DMA((2,)),
                ],
            ),
            compiler_params=pltpu.CompilerParams(
                dimension_semantics=("parallel",)),
        )

    def _get_call(b_pad):
        key = (bool(use_resident), b_pad)
        if key not in _call_cache:
            _call_cache[key] = _resident_call(b_pad) if use_resident else _hbm_call(b_pad)
        return _call_cache[key]

    def forward_indices(src_idx, dst_idx):
        """Batched: 1-D arrays of class indices (length B) -> (B,) float32."""
        src_idx = jnp.asarray(src_idx, dtype=jnp.int32).reshape(-1)
        dst_idx = jnp.asarray(dst_idx, dtype=jnp.int32).reshape(-1)
        b = int(src_idx.shape[0])
        b_pad = max(tb, _round_up(b, tb))        # always pad to >=128 lanes
        if b_pad != b:
            pad = b_pad - b
            src_idx = jnp.concatenate([src_idx, jnp.zeros((pad,), jnp.int32)])
            dst_idx = jnp.concatenate([dst_idx, jnp.zeros((pad,), jnp.int32)])
        call = _get_call(b_pad)
        if use_resident:
            out = call(src_idx.reshape(b_pad, 1), dst_idx.reshape(b_pad, 1), table)
        else:
            out = call(src_idx, dst_idx, table)
        return out[:b, 0]

    def forward_pairs(pairs):
        """Batched: list of (x_name, y_name) pairs -> (B,) float32."""
        src = [class_index_dict[x] for x, _ in pairs]
        dst = [class_index_dict[y] for _, y in pairs]
        return forward_indices(jnp.asarray(src, jnp.int32),
                               jnp.asarray(dst, jnp.int32))

    def forward(data):
        """Single pair; matches the torch module's forward: returns shape (1,)."""
        # TODO(synk): the class-name -> index mapping is a host-side Python dict
        # lookup (exactly as in the torch module); it has no Pallas equivalent.
        x, y = data
        return forward_indices([class_index_dict[x]], [class_index_dict[y]])

    return forward, forward_pairs, forward_indices, class_index_dict


def _reference(table_f32, src_idx, dst_idx):
    s = jnp.sum(table_f32[src_idx] * table_f32[dst_idx], axis=-1)
    return 1.0 - jax.nn.sigmoid(s)


if __name__ == "__main__":
    # Deterministic synthetic class embeddings: 8 classes, embedding size 128.
    num_classes, emb_size = 8, 128
    key = jax.random.PRNGKey(0)
    vecs = jax.random.normal(key, (num_classes, emb_size), dtype=jnp.float32)
    class_embeddings = {f"class_{i}": [float(v) for v in vecs[i]]
                        for i in range(num_classes)}
    table_f32 = jnp.asarray(list(class_embeddings.values()), dtype=jnp.float32)

    B = 160   # > 128 -> padding + 2 outer blocks (exercises v7x 2-core sharding)
    pairs = [(f"class_{i % num_classes}", f"class_{(3 * i + 1) % num_classes}")
             for i in range(B)]

    # ---- fast path: VMEM-resident table (the normal case) -------------------
    fwd, fwd_pairs, fwd_idx, idx_dict = make_cosine_similarity(class_embeddings)

    src = jnp.asarray([idx_dict[x] for x, _ in pairs], jnp.int32)
    dst = jnp.asarray([idx_dict[y] for _, y in pairs], jnp.int32)
    refB = _reference(table_f32, src, dst)

    out1 = jax.block_until_ready(fwd(("class_2", "class_5")))        # single pair
    ref1 = _reference(table_f32,
                      jnp.asarray([idx_dict["class_2"]], jnp.int32),
                      jnp.asarray([idx_dict["class_5"]], jnp.int32))
    assert out1.shape == (1,)
    assert jnp.allclose(out1, ref1, atol=1e-5, rtol=1e-3), (out1, ref1)

    outB = jax.block_until_ready(fwd_pairs(pairs))                    # batched
    assert outB.shape == (B,)
    assert jnp.allclose(outB, refB, atol=1e-5, rtol=1e-3), (outB, refB)

    # ---- bf16 table variant (recommended for large tables) ------------------
    _, fwd_pairs_bf16, _, _ = make_cosine_similarity(class_embeddings,
                                                     table_dtype=jnp.bfloat16)
    out_bf = jax.block_until_ready(fwd_pairs_bf16(pairs))
    ref_bf = _reference(table_f32.astype(jnp.bfloat16).astype(jnp.float32), src, dst)
    assert jnp.allclose(out_bf, ref_bf, atol=1e-5, rtol=1e-3), (out_bf, ref_bf)

    # ---- fallback path: table kept in HBM, manual per-block row gather ------
    # (normally only taken when the table exceeds the per-generation VMEM
    #  budget; forced here on the small table so the path is exercised too)
    _, fwd_pairs_hbm, _, _ = make_cosine_similarity(class_embeddings,
                                                    force_hbm_gather=True)
    outH = jax.block_until_ready(fwd_pairs_hbm(pairs))
    assert jnp.allclose(outH, refB, atol=1e-5, rtol=1e-3), (outH, refB)

    print("KERNEL_OK")
</pallas_src>

<mosaic_0001>
module attributes {stable_mosaic.version = 11 : i64} {
  func.func @_resident_table_kernel(%arg0: i32, %arg1: memref<128x1xi32, #tpu.memory_space<vmem>>, %arg2: memref<128x1xi32, #tpu.memory_space<vmem>>, %arg3: memref<128x128xf32, #tpu.memory_space<vmem>>, %arg4: memref<128x1xf32, #tpu.memory_space<vmem>>) attributes {dimension_semantics = [#tpu.dimension_semantics<parallel>], iteration_bounds = array<i64: 1>, scalar_prefetch = 0 : i64, scratch_operands = 0 : i64, tpu.core_type = #tpu.core_type<tc>, window_params = [{transform_indices = @transform_0, window_bounds = array<i64: 128, 1>}, {transform_indices = @transform_1, window_bounds = array<i64: 128, 1>}, {pipeline_mode = #tpu.pipeline_mode<synchronous>, transform_indices = @transform_2, window_bounds = array<i64: 128, 128>}, {transform_indices = @transform_3, window_bounds = array<i64: 128, 1>}]} {
    %c0 = arith.constant 0 : index
    %c0_0 = arith.constant 0 : index
    %0 = vector.load %arg3[%c0, %c0_0] : memref<128x128xf32, #tpu.memory_space<vmem>>, vector<128x128xf32>
    %1 = tpu.iota {dimensions = array<i32: 1>} : vector<128x128xi32>
    %c0_1 = arith.constant 0 : index
    %c0_2 = arith.constant 0 : index
    %2 = vector.load %arg1[%c0_1, %c0_2] : memref<128x1xi32, #tpu.memory_space<vmem>>, vector<128x1xi32>
    %3 = vector.broadcast %2 : vector<128x1xi32> to vector<128x128xi32>
    %4 = arith.cmpi eq, %1, %3 : vector<128x128xi32>
    %cst = arith.constant 1.000000e+00 : f32
    %cst_3 = arith.constant 0.000000e+00 : f32
    %5 = vector.broadcast %cst : f32 to vector<128x128xf32>
    %6 = vector.broadcast %cst_3 : f32 to vector<128x128xf32>
    %7 = arith.select %4, %5, %6 : vector<128x128xi1>, vector<128x128xf32>
    %c0_4 = arith.constant 0 : index
    %c0_5 = arith.constant 0 : index
    %8 = vector.load %arg2[%c0_4, %c0_5] : memref<128x1xi32, #tpu.memory_space<vmem>>, vector<128x1xi32>
    %9 = vector.broadcast %8 : vector<128x1xi32> to vector<128x128xi32>
    %10 = arith.cmpi eq, %1, %9 : vector<128x128xi32>
    %cst_6 = arith.constant 1.000000e+00 : f32
    %cst_7 = arith.constant 0.000000e+00 : f32
    %11 = vector.broadcast %cst_6 : f32 to vector<128x128xf32>
    %12 = vector.broadcast %cst_7 : f32 to vector<128x128xf32>
    %13 = arith.select %10, %11, %12 : vector<128x128xi1>, vector<128x128xf32>
    %cst_8 = arith.constant dense<0.000000e+00> : vector<128x128xf32>
    %14 = tpu.matmul %7, %0, %cst_8 {dimension_numbers = #tpu.dot_dimension_numbers<[1], [0], [0], [1], [0, 0, 1, 1], [], []>} : vector<128x128xf32>, vector<128x128xf32>, vector<128x128xf32> -> vector<128x128xf32>
    %cst_9 = arith.constant dense<0.000000e+00> : vector<128x128xf32>
    %15 = tpu.matmul %13, %0, %cst_9 {dimension_numbers = #tpu.dot_dimension_numbers<[1], [0], [0], [1], [0, 0, 1, 1], [], []>} : vector<128x128xf32>, vector<128x128xf32>, vector<128x128xf32> -> vector<128x128xf32>
    %16 = arith.mulf %14, %15 : vector<128x128xf32>
    %cst_10 = arith.constant dense<0.000000e+00> : vector<128xf32>
    %17 = vector.multi_reduction <add>, %16, %cst_10 [1] : vector<128x128xf32> to vector<128xf32>
    %18 = vector.shape_cast %17 : vector<128xf32> to vector<128x1xf32>
    %cst_11 = arith.constant 0.000000e+00 : f32
    %19 = vector.broadcast %cst_11 : f32 to vector<128x1xf32>
    %20 = arith.subf %19, %18 : vector<128x1xf32>
    %21 = arith.negf %20 : vector<128x1xf32>
    %22 = math.exp %21 : vector<128x1xf32>
    %cst_12 = arith.constant 1.000000e+00 : f32
    %23 = vector.broadcast %cst_12 : f32 to vector<128x1xf32>
    %24 = arith.addf %23, %22 : vector<128x1xf32>
    %25 = arith.divf %23, %24 : vector<128x1xf32>
    %c0_13 = arith.constant 0 : index
    %c0_14 = arith.constant 0 : index
    %26 = vector.load %arg4[%c0_13, %c0_14] : memref<128x1xf32, #tpu.memory_space<vmem>>, vector<128x1xf32>
    tpu.vector_store %arg4[%c0_13, %c0_14], %25 {strides = array<i32>} : memref<128x1xf32, #tpu.memory_space<vmem>>, vector<128x1xf32>,
    return
  }
  func.func @transform_0(%arg0: i32) -> (i32, i32) {
    %c0_i32 = arith.constant 0 : i32
    %c0_i32_0 = arith.constant 0 : i32
    return %arg0, %c0_i32 : i32, i32
  }
  func.func @transform_1(%arg0: i32) -> (i32, i32) {
    %c0_i32 = arith.constant 0 : i32
    %c0_i32_0 = arith.constant 0 : i32
    return %arg0, %c0_i32 : i32, i32
  }
  func.func @transform_2(%arg0: i32) -> (i32, i32) {
    %c0_i32 = arith.constant 0 : i32
    %c0_i32_0 = arith.constant 0 : i32
    %c0_i32_1 = arith.constant 0 : i32
    return %c0_i32, %c0_i32_0 : i32, i32
  }
  func.func @transform_3(%arg0: i32) -> (i32, i32) {
    %c0_i32 = arith.constant 0 : i32
    %c0_i32_0 = arith.constant 0 : i32
    return %arg0, %c0_i32 : i32, i32
  }
}

</mosaic_0001>

<llo_original>
// kernel: tpu_custom_call.1
$region0: #{tpu_custom_call.1}
  #allocation0 [shape = 'u32[]', space=smem, size = 0x4, offset = 0x4, fixed_abs, tag = 'smem constant byte address 0x4 - core index']
  #allocation1 [shape = 'u32[144,128]{1,0:T(1,128)}', space=vmem, size = 0x12000, scoped, tag = 'internal scratch']
  %s0 = inlined_call_operand.vmem [shape: s32[128,1], index: 0, kind: input, shape index: {}]
  %s1 = inlined_call_operand.vmem [shape: s32[128,1], index: 1, kind: input, shape index: {}]
  %s2 = inlined_call_operand.vmem [shape: f32[128,128], index: 2, kind: input, shape index: {}]
  %s3 = inlined_call_operand.vmem [shape: f32[128,1], index: 3, kind: output, shape index: {}]
  %s4 = sld [smem:[#allocation0]]
  $region22: #{tpu_custom_call.1} parent=0
    _
  %s6 = ssub.s32 1, %s4
  %s7 = scalar_select 0, %s6, %s4
  // Predicated region
  $region2: #{tpu_custom_call.1} parent=0 // pred_check
    _
  $region3: #{tpu_custom_call.1} parent=0 // pred_check_branch
    %9 = sbr.rel (0) target = $region5
  $region4: #{tpu_custom_call.1} parent=0 // pred_region
    _
  $region5: #{tpu_custom_call.1} parent=0 // pred_fallthru
    _
  // Predicated region
  $region6: #{tpu_custom_call.1} parent=0 // pred_check
    _
  $region7: #{tpu_custom_call.1} parent=0 // pred_check_branch
    %11 = sbr.rel (0) target = $region9
  $region8: #{tpu_custom_call.1} parent=0 // pred_region
    _
  $region9: #{tpu_custom_call.1} parent=0 // pred_fallthru
    _
  // Predicated region
  $region10: #{tpu_custom_call.1} parent=0 // pred_check
    _
  $region11: #{tpu_custom_call.1} parent=0 // pred_check_branch
    %13 = sbr.rel (0) target = $region13
  $region12: #{tpu_custom_call.1} parent=0 // pred_region
    _
  $region13: #{tpu_custom_call.1} parent=0 // pred_fallthru
    _
  %v14 = vld [vmem:[%s2] sm:$0xff]
  %v15 = vld [vmem:[%s2 + $0x8] sm:$0xff]
  %v16 = vld [vmem:[%s2 + $0x10] sm:$0xff]
  %v17 = vld [vmem:[%s2 + $0x18] sm:$0xff]
  %v18 = vld [vmem:[%s2 + $0x20] sm:$0xff]
  %v19 = vld [vmem:[%s2 + $0x28] sm:$0xff]
  %v20 = vld [vmem:[%s2 + $0x30] sm:$0xff]
  %v21 = vld [vmem:[%s2 + $0x38] sm:$0xff]
  %v22 = vld [vmem:[%s2 + $0x40] sm:$0xff]
  %v23 = vld [vmem:[%s2 + $0x48] sm:$0xff]
  %v24 = vld [vmem:[%s2 + $0x50] sm:$0xff]
  %v25 = vld [vmem:[%s2 + $0x58] sm:$0xff]
  %v26 = vld [vmem:[%s2 + $0x60] sm:$0xff]
  %v27 = vld [vmem:[%s2 + $0x68] sm:$0xff]
  %v28 = vld [vmem:[%s2 + $0x70] sm:$0xff]
  %v29 = vld [vmem:[%s2 + $0x78] sm:$0xff]
  %v30 = vlaneseq
  %v31 = vand.u32 %v30, 127
  %v32 = vld [vmem:[%s0] sm:$0xff]
  %v33 = vld [vmem:[%s0 + $0x8] sm:$0xff]
  %v34 = vld [vmem:[%s0 + $0x10] sm:$0xff]
  %v35 = vld [vmem:[%s0 + $0x18] sm:$0xff]
  %v36 = vld [vmem:[%s0 + $0x20] sm:$0xff]
  %v37 = vld [vmem:[%s0 + $0x28] sm:$0xff]
  %v38 = vld [vmem:[%s0 + $0x30] sm:$0xff]
  %v39 = vld [vmem:[%s0 + $0x38] sm:$0xff]
  %v40 = vld [vmem:[%s0 + $0x40] sm:$0xff]
  %v41 = vld [vmem:[%s0 + $0x48] sm:$0xff]
  %v42 = vld [vmem:[%s0 + $0x50] sm:$0xff]
  %v43 = vld [vmem:[%s0 + $0x58] sm:$0xff]
  %v44 = vld [vmem:[%s0 + $0x60] sm:$0xff]
  %v45 = vld [vmem:[%s0 + $0x68] sm:$0xff]
  %v46 = vld [vmem:[%s0 + $0x70] sm:$0xff]
  %v47 = vld [vmem:[%s0 + $0x78] sm:$0xff]
  %48 = vset.pattern.permute.xlu0 0
  %49 = vperm.xlu0 %48, %v32
  %v50 = vpop.permute.xlu0 %49
  %51 = vset.pattern.permute.xlu0 0
  %52 = vperm.xlu0 %51, %v33
  %v53 = vpop.permute.xlu0 %52
  %54 = vset.pattern.permute.xlu0 0
  %55 = vperm.xlu0 %54, %v34
  %v56 = vpop.permute.xlu0 %55
  %57 = vset.pattern.permute.xlu0 0
  %58 = vperm.xlu0 %57, %v35
  %v59 = vpop.permute.xlu0 %58
  %60 = vset.pattern.permute.xlu0 0
  %61 = vperm.xlu0 %60, %v36
  %v62 = vpop.permute.xlu0 %61
  %63 = vset.pattern.permute.xlu0 0
  %64 = vperm.xlu0 %63, %v37
  %v65 = vpop.permute.xlu0 %64
  %66 = vset.pattern.permute.xlu0 0
  %67 = vperm.xlu0 %66, %v38
  %v68 = vpop.permute.xlu0 %67
  %69 = vset.pattern.permute.xlu0 0
  %70 = vperm.xlu0 %69, %v39
  %v71 = vpop.permute.xlu0 %70
  %72 = vset.pattern.permute.xlu0 0
  %73 = vperm.xlu0 %72, %v40
  %v74 = vpop.permute.xlu0 %73
  %75 = vset.pattern.permute.xlu0 0
  %76 = vperm.xlu0 %75, %v41
  %v77 = vpop.permute.xlu0 %76
  %78 = vset.pattern.permute.xlu0 0
  %79 = vperm.xlu0 %78, %v42
  %v80 = vpop.permute.xlu0 %79
  %81 = vset.pattern.permute.xlu0 0
  %82 = vperm.xlu0 %81, %v43
  %v83 = vpop.permute.xlu0 %82
  %84 = vset.pattern.permute.xlu0 0
  %85 = vperm.xlu0 %84, %v44
  %v86 = vpop.permute.xlu0 %85
  %87 = vset.pattern.permute.xlu0 0
  %88 = vperm.xlu0 %87, %v45
  %v89 = vpop.permute.xlu0 %88
  %90 = vset.pattern.permute.xlu0 0
  %91 = vperm.xlu0 %90, %v46
  %v92 = vpop.permute.xlu0 %91
  %93 = vset.pattern.permute.xlu0 0
  %94 = vperm.xlu0 %93, %v47
  %v95 = vpop.permute.xlu0 %94
  %vm96 = vcmp.eq.s32.totalorder %v31, %v50
  %vm97 = vcmp.eq.s32.totalorder %v31, %v53
  %vm98 = vcmp.eq.s32.totalorder %v31, %v56
  %vm99 = vcmp.eq.s32.totalorder %v31, %v59
  %vm100 = vcmp.eq.s32.totalorder %v31, %v62
  %vm101 = vcmp.eq.s32.totalorder %v31, %v65
  %vm102 = vcmp.eq.s32.totalorder %v31, %v68
  %vm103 = vcmp.eq.s32.totalorder %v31, %v71
  %vm104 = vcmp.eq.s32.totalorder %v31, %v74
  %vm105 = vcmp.eq.s32.totalorder %v31, %v77
  %vm106 = vcmp.eq.s32.totalorder %v31, %v80
  %vm107 = vcmp.eq.s32.totalorder %v31, %v83
  %vm108 = vcmp.eq.s32.totalorder %v31, %v86
  %vm109 = vcmp.eq.s32.totalorder %v31, %v89
  %vm110 = vcmp.eq.s32.totalorder %v31, %v92
  %vm111 = vcmp.eq.s32.totalorder %v31, %v95
  %v112 = vsel %vm96, 1.0, 0.0
  %v113 = vsel %vm97, 1.0, 0.0
  %v114 = vsel %vm98, 1.0, 0.0
  %v115 = vsel %vm99, 1.0, 0.0
  %v116 = vsel %vm100, 1.0, 0.0
  %v117 = vsel %vm101, 1.0, 0.0
  %v118 = vsel %vm102, 1.0, 0.0
  %v119 = vsel %vm103, 1.0, 0.0
  %v120 = vsel %vm104, 1.0, 0.0
  %v121 = vsel %vm105, 1.0, 0.0
  %v122 = vsel %vm106, 1.0, 0.0
  %v123 = vsel %vm107, 1.0, 0.0
  %v124 = vsel %vm108, 1.0, 0.0
  %v125 = vsel %vm109, 1.0, 0.0
  %v126 = vsel %vm110, 1.0, 0.0
  %v127 = vsel %vm111, 1.0, 0.0
  %v128 = vld [vmem:[%s1] sm:$0xff]
  %v129 = vld [vmem:[%s1 + $0x8] sm:$0xff]
  %v130 = vld [vmem:[%s1 + $0x10] sm:$0xff]
  %v131 = vld [vmem:[%s1 + $0x18] sm:$0xff]
  %v132 = vld [vmem:[%s1 + $0x20] sm:$0xff]
  %v133 = vld [vmem:[%s1 + $0x28] sm:$0xff]
  %v134 = vld [vmem:[%s1 + $0x30] sm:$0xff]
  %v135 = vld [vmem:[%s1 + $0x38] sm:$0xff]
  %v136 = vld [vmem:[%s1 + $0x40] sm:$0xff]
  %v137 = vld [vmem:[%s1 + $0x48] sm:$0xff]
  %v138 = vld [vmem:[%s1 + $0x50] sm:$0xff]
  %v139 = vld [vmem:[%s1 + $0x58] sm:$0xff]
  %v140 = vld [vmem:[%s1 + $0x60] sm:$0xff]
  %v141 = vld [vmem:[%s1 + $0x68] sm:$0xff]
  %v142 = vld [vmem:[%s1 + $0x70] sm:$0xff]
  %v143 = vld [vmem:[%s1 + $0x78] sm:$0xff]
  %144 = vset.pattern.permute.xlu0 0
  %145 = vperm.xlu0 %144, %v128
  %v146 = vpop.permute.xlu0 %145
  %147 = vset.pattern.permute.xlu0 0
  %148 = vperm.xlu0 %147, %v129
  %v149 = vpop.permute.xlu0 %148
  %150 = vset.pattern.permute.xlu0 0
  %151 = vperm.xlu0 %150, %v130
  %v152 = vpop.permute.xlu0 %151
  %153 = vset.pattern.permute.xlu0 0
  %154 = vperm.xlu0 %153, %v131
  %v155 = vpop.permute.xlu0 %154
  %156 = vset.pattern.permute.xlu0 0
  %157 = vperm.xlu0 %156, %v132
  %v158 = vpop.permute.xlu0 %157
  %159 = vset.pattern.permute.xlu0 0
  %160 = vperm.xlu0 %159, %v133
  %v161 = vpop.permute.xlu0 %160
  %162 = vset.pattern.permute.xlu0 0
  %163 = vperm.xlu0 %162, %v134
  %v164 = vpop.permute.xlu0 %163
  %165 = vset.pattern.permute.xlu0 0
  %166 = vperm.xlu0 %165, %v135
  %v167 = vpop.permute.xlu0 %166
  %168 = vset.pattern.permute.xlu0 0
  %169 = vperm.xlu0 %168, %v136
  %v170 = vpop.permute.xlu0 %169
  %171 = vset.pattern.permute.xlu0 0
  %172 = vperm.xlu0 %171, %v137
  %v173 = vpop.permute.xlu0 %172
  %174 = vset.pattern.permute.xlu0 0
  %175 = vperm.xlu0 %174, %v138
  %v176 = vpop.permute.xlu0 %175
  %177 = vset.pattern.permute.xlu0 0
  %178 = vperm.xlu0 %177, %v139
  %v179 = vpop.permute.xlu0 %178
  %180 = vset.pattern.permute.xlu0 0
  %181 = vperm.xlu0 %180, %v140
  %v182 = vpop.permute.xlu0 %181
  %183 = vset.pattern.permute.xlu0 0
  %184 = vperm.xlu0 %183, %v141
  %v185 = vpop.permute.xlu0 %184
  %186 = vset.pattern.permute.xlu0 0
  %187 = vperm.xlu0 %186, %v142
  %v188 = vpop.permute.xlu0 %187
  %189 = vset.pattern.permute.xlu0 0
  %190 = vperm.xlu0 %189, %v143
  %v191 = vpop.permute.xlu0 %190
  %vm192 = vcmp.eq.s32.totalorder %v31, %v146
  %vm193 = vcmp.eq.s32.totalorder %v31, %v149
  %vm194 = vcmp.eq.s32.totalorder %v31, %v152
  %vm195 = vcmp.eq.s32.totalorder %v31, %v155
  %vm196 = vcmp.eq.s32.totalorder %v31, %v158
  %vm197 = vcmp.eq.s32.totalorder %v31, %v161
  %vm198 = vcmp.eq.s32.totalorder %v31, %v164
  %vm199 = vcmp.eq.s32.totalorder %v31, %v167
  %vm200 = vcmp.eq.s32.totalorder %v31, %v170
  %vm201 = vcmp.eq.s32.totalorder %v31, %v173
  %vm202 = vcmp.eq.s32.totalorder %v31, %v176
  %vm203 = vcmp.eq.s32.totalorder %v31, %v179
  %vm204 = vcmp.eq.s32.totalorder %v31, %v182
  %vm205 = vcmp.eq.s32.totalorder %v31, %v185
  %vm206 = vcmp.eq.s32.totalorder %v31, %v188
  %vm207 = vcmp.eq.s32.totalorder %v31, %v191
  %v208 = vsel %vm192, 1.0, 0.0
  %v209 = vsel %vm193, 1.0, 0.0
  %v210 = vsel %vm194, 1.0, 0.0
  %v211 = vsel %vm195, 1.0, 0.0
  %v212 = vsel %vm196, 1.0, 0.0
  %v213 = vsel %vm197, 1.0, 0.0
  %v214 = vsel %vm198, 1.0, 0.0
  %v215 = vsel %vm199, 1.0, 0.0
  %v216 = vsel %vm200, 1.0, 0.0
  %v217 = vsel %vm201, 1.0, 0.0
  %v218 = vsel %vm202, 1.0, 0.0
  %v219 = vsel %vm203, 1.0, 0.0
  %v220 = vsel %vm204, 1.0, 0.0
  %v221 = vsel %vm205, 1.0, 0.0
  %v222 = vsel %vm206, 1.0, 0.0
  %v223 = vsel %vm207, 1.0, 0.0
  %224 = vmatprep.subr.mxu0 0.0
  %225 = vmatpush1.msra.mxu0 %v14
  %226 = vmatprep.subr.mxu0 0.0
  %227 = vmatpush1.msra.mxu0 %v15
  %228 = vmatprep.subr.mxu0 0.0
  %229 = vmatpush1.msra.mxu0 %v16
  %230 = vmatprep.subr.mxu0 0.0
  %231 = vmatpush1.msra.mxu0 %v17
  %232 = vmatprep.subr.mxu0 0.0
  %233 = vmatpush1.msra.mxu0 %v18
  %234 = vmatprep.subr.mxu0 0.0
  %235 = vmatpush1.msra.mxu0 %v19
  %236 = vmatprep.subr.mxu0 0.0
  %237 = vmatpush1.msra.mxu0 %v20
  %238 = vmatprep.subr.mxu0 0.0
  %239 = vmatpush1.msra.mxu0 %v21
  %240 = vmatprep.subr.mxu0 0.0
  %241 = vmatpush1.msra.mxu0 %v22
  %242 = vmatprep.subr.mxu0 0.0
  %243 = vmatpush1.msra.mxu0 %v23
  %244 = vmatprep.subr.mxu0 0.0
  %245 = vmatpush1.msra.mxu0 %v24
  %246 = vmatprep.subr.mxu0 0.0
  %247 = vmatpush1.msra.mxu0 %v25
  %248 = vmatprep.subr.mxu0 0.0
  %249 = vmatpush1.msra.mxu0 %v26
  %250 = vmatprep.subr.mxu0 0.0
  %251 = vmatpush1.msra.mxu0 %v27
  %252 = vmatprep.subr.mxu0 0.0
  %253 = vmatpush1.msra.mxu0 %v28
  %254 = vmatprep.subr.mxu0 0.0
  %255 = vmatpush1.msra.mxu0 %v29
  %256 = vmatprep.subr.mxu0 0.0
  %257 = vmatpush1.msra.mxu0 0.0
  %258 = vmatprep.subr.mxu0 0.0
  %259 = vmatpush1.msra.mxu0 0.0
  %260 = vmatprep.subr.mxu0 0.0
  %261 = vmatpush1.msra.mxu0 0.0
  %262 = vmatprep.subr.mxu0 0.0
  %263 = vmatpush1.msra.mxu0 0.0
  %264 = vmatprep.subr.mxu0 0.0
  %265 = vmatpush1.msra.mxu0 0.0
  %266 = vmatprep.subr.mxu0 0.0
  %267 = vmatpush1.msra.mxu0 0.0
  %268 = vmatprep.subr.mxu0 0.0
  %269 = vmatpush1.msra.mxu0 0.0
  %270 = vmatprep.subr.mxu0 0.0
  %271 = vmatpush1.msra.mxu0 0.0
  %272 = vmatprep.subr.mxu0 0.0
  %273 = vmatpush1.msra.mxu0 0.0
  %274 = vmatprep.subr.mxu0 0.0
  %275 = vmatpush1.msra.mxu0 0.0
  %276 = vmatprep.subr.mxu0 0.0
  %277 = vmatpush1.msra.mxu0 0.0
  %278 = vmatprep.subr.mxu0 0.0
  %279 = vmatpush1.msra.mxu0 0.0
  %280 = vmatprep.subr.mxu0 0.0
  %281 = vmatpush1.msra.mxu0 0.0
  %282 = vmatprep.subr.mxu0 0.0
  %283 = vmatpush1.msra.mxu0 0.0
  %284 = vmatprep.subr.mxu0 0.0
  %285 = vmatpush1.msra.mxu0 0.0
  %286 = vmatprep.subr.mxu0 0.0
  %287 = vmatpush1.msra.mxu0 0.0
  %288 = vmatprep.mubr.f32.mxu0 0.0
  %289 = vmatmul.mubr.f32.gmra.mrb[0].mxu0 %v112
  %v290 = vpop.f32.mrb[0].mxu0
  %v291 = vadd.f32 0.0, %v290
  %v292 = vpop.f32.mrb[0].mxu0
  %293 = vmatprep.mubr.f32.mxu0 0.0
  %294 = vmatmul.mubr.f32.gmra.mrb[0].mxu0 %v113
  %v295 = vpop.f32.mrb[0].mxu0
  %v296 = vadd.f32 0.0, %v295
  %v297 = vpop.f32.mrb[0].mxu0
  %298 = vmatprep.mubr.f32.mxu0 0.0
  %299 = vmatmul.mubr.f32.gmra.mrb[0].mxu0 %v114
  %v300 = vpop.f32.mrb[0].mxu0
  %v301 = vadd.f32 0.0, %v300
  %v302 = vpop.f32.mrb[0].mxu0
  %303 = vmatprep.mubr.f32.mxu0 0.0
  %304 = vmatmul.mubr.f32.gmra.mrb[0].mxu0 %v115
  %v305 = vpop.f32.mrb[0].mxu0
  %v306 = vadd.f32 0.0, %v305
  %v307 = vpop.f32.mrb[0].mxu0
  %308 = vmatprep.mubr.f32.mxu0 0.0
  %309 = vmatmul.mubr.f32.gmra.mrb[0].mxu0 %v116
  %v310 = vpop.f32.mrb[0].mxu0
  %v311 = vadd.f32 0.0, %v310
  %v312 = vpop.f32.mrb[0].mxu0
  %313 = vmatprep.mubr.f32.mxu0 0.0
  %314 = vmatmul.mubr.f32.gmra.mrb[0].mxu0 %v117
  %v315 = vpop.f32.mrb[0].mxu0
  %v316 = vadd.f32 0.0, %v315
  %v317 = vpop.f32.mrb[0].mxu0
  %318 = vmatprep.mubr.f32.mxu0 0.0
  %319 = vmatmul.mubr.f32.gmra.mrb[0].mxu0 %v118
  %v320 = vpop.f32.mrb[0].mxu0
  %v321 = vadd.f32 0.0, %v320
  %v322 = vpop.f32.mrb[0].mxu0
  %323 = vmatprep.mubr.f32.mxu0 0.0
  %324 = vmatmul.mubr.f32.gmra.mrb[0].mxu0 %v119
  %v325 = vpop.f32.mrb[0].mxu0
  %v326 = vadd.f32 0.0, %v325
  %v327 = vpop.f32.mrb[0].mxu0
  %328 = vmatprep.mubr.f32.mxu0 0.0
  %329 = vmatmul.mubr.f32.gmra.mrb[0].mxu0 %v120
  %v330 = vpop.f32.mrb[0].mxu0
  %v331 = vadd.f32 0.0, %v330
  %v332 = vpop.f32.mrb[0].mxu0
  %333 = vmatprep.mubr.f32.mxu0 0.0
  %334 = vmatmul.mubr.f32.gmra.mrb[0].mxu0 %v121
  %v335 = vpop.f32.mrb[0].mxu0
  %v336 = vadd.f32 0.0, %v335
  %v337 = vpop.f32.mrb[0].mxu0
  %338 = vmatprep.mubr.f32.mxu0 0.0
  %339 = vmatmul.mubr.f32.gmra.mrb[0].mxu0 %v122
  %v340 = vpop.f32.mrb[0].mxu0
  %v341 = vadd.f32 0.0, %v340
  %v342 = vpop.f32.mrb[0].mxu0
  %343 = vmatprep.mubr.f32.mxu0 0.0
  %344 = vmatmul.mubr.f32.gmra.mrb[0].mxu0 %v123
  %v345 = vpop.f32.mrb[0].mxu0
  %v346 = vadd.f32 0.0, %v345
  %v347 = vpop.f32.mrb[0].mxu0
  %348 = vmatprep.mubr.f32.mxu0 0.0
  %349 = vmatmul.mubr.f32.gmra.mrb[0].mxu0 %v124
  %v350 = vpop.f32.mrb[0].mxu0
  %v351 = vadd.f32 0.0, %v350
  %v352 = vpop.f32.mrb[0].mxu0
  %353 = vmatprep.mubr.f32.mxu0 0.0
  %354 = vmatmul.mubr.f32.gmra.mrb[0].mxu0 %v125
  %v355 = vpop.f32.mrb[0].mxu0
  %v356 = vadd.f32 0.0, %v355
  %v357 = vpop.f32.mrb[0].mxu0
  %358 = vmatprep.mubr.f32.mxu0 0.0
  %359 = vmatmul.mubr.f32.gmra.mrb[0].mxu0 %v126
  %v360 = vpop.f32.mrb[0].mxu0
  %v361 = vadd.f32 0.0, %v360
  %v362 = vpop.f32.mrb[0].mxu0
  %363 = vmatprep.mubr.f32.mxu0 0.0
  %364 = vmatmul.mubr.f32.gmra.mrb[0].mxu0 %v127
  %v365 = vpop.f32.mrb[0].mxu0
  %v366 = vadd.f32 0.0, %v365
  %v367 = vpop.f32.mrb[0].mxu0
  %368 = vdwg.mxu0
  %369 = vmatprep.subr.mxu0 0.0
  %370 = vmatpush1.msra.mxu0 %v14
  %371 = vmatprep.subr.mxu0 0.0
  %372 = vmatpush1.msra.mxu0 %v15
  %373 = vmatprep.subr.mxu0 0.0
  %374 = vmatpush1.msra.mxu0 %v16
  %375 = vmatprep.subr.mxu0 0.0
  %376 = vmatpush1.msra.mxu0 %v17
  %377 = vmatprep.subr.mxu0 0.0
  %378 = vmatpush1.msra.mxu0 %v18
  %379 = vmatprep.subr.mxu0 0.0
  %380 = vmatpush1.msra.mxu0 %v19
  %381 = vmatprep.subr.mxu0 0.0
  %382 = vmatpush1.msra.mxu0 %v20
  %383 = vmatprep.subr.mxu0 0.0
  %384 = vmatpush1.msra.mxu0 %v21
  %385 = vmatprep.subr.mxu0 0.0
  %386 = vmatpush1.msra.mxu0 %v22
  %387 = vmatprep.subr.mxu0 0.0
  %388 = vmatpush1.msra.mxu0 %v23
  %389 = vmatprep.subr.mxu0 0.0
  %390 = vmatpush1.msra.mxu0 %v24
  %391 = vmatprep.subr.mxu0 0.0
  %392 = vmatpush1.msra.mxu0 %v25
  %393 = vmatprep.subr.mxu0 0.0
  %394 = vmatpush1.msra.mxu0 %v26
  %395 = vmatprep.subr.mxu0 0.0
  %396 = vmatpush1.msra.mxu0 %v27
  %397 = vmatprep.subr.mxu0 0.0
  %398 = vmatpush1.msra.mxu0 %v28
  %399 = vmatprep.subr.mxu0 0.0
  %400 = vmatpush1.msra.mxu0 %v29
  %401 = vmatprep.subr.mxu0 0.0
  %402 = vmatpush1.msra.mxu0 0.0
  %403 = vmatprep.subr.mxu0 0.0
  %404 = vmatpush1.msra.mxu0 0.0
  %405 = vmatprep.subr.mxu0 0.0
  %406 = vmatpush1.msra.mxu0 0.0
  %407 = vmatprep.subr.mxu0 0.0
  %408 = vmatpush1.msra.mxu0 0.0
  %409 = vmatprep.subr.mxu0 0.0
  %410 = vmatpush1.msra.mxu0 0.0
  %411 = vmatprep.subr.mxu0 0.0
  %412 = vmatpush1.msra.mxu0 0.0
  %413 = vmatprep.subr.mxu0 0.0
  %414 = vmatpush1.msra.mxu0 0.0
  %415 = vmatprep.subr.mxu0 0.0
  %416 = vmatpush1.msra.mxu0 0.0
  %417 = vmatprep.subr.mxu0 0.0
  %418 = vmatpush1.msra.mxu0 0.0
  %419 = vmatprep.subr.mxu0 0.0
  %420 = vmatpush1.msra.mxu0 0.0
  %421 = vmatprep.subr.mxu0 0.0
  %422 = vmatpush1.msra.mxu0 0.0
  %423 = vmatprep.subr.mxu0 0.0
  %424 = vmatpush1.msra.mxu0 0.0
  %425 = vmatprep.subr.mxu0 0.0
  %426 = vmatpush1.msra.mxu0 0.0
  %427 = vmatprep.subr.mxu0 0.0
  %428 = vmatpush1.msra.mxu0 0.0
  %429 = vmatprep.subr.mxu0 0.0
  %430 = vmatpush1.msra.mxu0 0.0
  %431 = vmatprep.subr.mxu0 0.0
  %432 = vmatpush1.msra.mxu0 0.0
  %433 = vmatprep.mubr.f32.mxu0 0.0
  %434 = vmatmul.mubr.f32.gmra.mrb[0].mxu0 %v208
  %v435 = vpop.f32.mrb[0].mxu0
  %v436 = vadd.f32 0.0, %v435
  %v437 = vpop.f32.mrb[0].mxu0
  %438 = vmatprep.mubr.f32.mxu0 0.0
  %439 = vmatmul.mubr.f32.gmra.mrb[0].mxu0 %v209
  %v440 = vpop.f32.mrb[0].mxu0
  %v441 = vadd.f32 0.0, %v440
  %v442 = vpop.f32.mrb[0].mxu0
  %443 = vmatprep.mubr.f32.mxu0 0.0
  %444 = vmatmul.mubr.f32.gmra.mrb[0].mxu0 %v210
  %v445 = vpop.f32.mrb[0].mxu0
  %v446 = vadd.f32 0.0, %v445
  %v447 = vpop.f32.mrb[0].mxu0
  %448 = vmatprep.mubr.f32.mxu0 0.0
  %449 = vmatmul.mubr.f32.gmra.mrb[0].mxu0 %v211
  %v450 = vpop.f32.mrb[0].mxu0
  %v451 = vadd.f32 0.0, %v450
  %v452 = vpop.f32.mrb[0].mxu0
  %453 = vmatprep.mubr.f32.mxu0 0.0
  %454 = vmatmul.mubr.f32.gmra.mrb[0].mxu0 %v212
  %v455 = vpop.f32.mrb[0].mxu0
  %v456 = vadd.f32 0.0, %v455
  %v457 = vpop.f32.mrb[0].mxu0
  %458 = vmatprep.mubr.f32.mxu0 0.0
  %459 = vmatmul.mubr.f32.gmra.mrb[0].mxu0 %v213
  %v460 = vpop.f32.mrb[0].mxu0
  %v461 = vadd.f32 0.0, %v460
  %v462 = vpop.f32.mrb[0].mxu0
  %463 = vmatprep.mubr.f32.mxu0 0.0
  %464 = vmatmul.mubr.f32.gmra.mrb[0].mxu0 %v214
  %v465 = vpop.f32.mrb[0].mxu0
  %v466 = vadd.f32 0.0, %v465
  %v467 = vpop.f32.mrb[0].mxu0
  %468 = vmatprep.mubr.f32.mxu0 0.0
  %469 = vmatmul.mubr.f32.gmra.mrb[0].mxu0 %v215
  %v470 = vpop.f32.mrb[0].mxu0
  %v471 = vadd.f32 0.0, %v470
  %v472 = vpop.f32.mrb[0].mxu0
  %473 = vmatprep.mubr.f32.mxu0 0.0
  %474 = vmatmul.mubr.f32.gmra.mrb[0].mxu0 %v216
  %v475 = vpop.f32.mrb[0].mxu0
  %v476 = vadd.f32 0.0, %v475
  %v477 = vpop.f32.mrb[0].mxu0
  %478 = vmatprep.mubr.f32.mxu0 0.0
  %479 = vmatmul.mubr.f32.gmra.mrb[0].mxu0 %v217
  %v480 = vpop.f32.mrb[0].mxu0
  %v481 = vadd.f32 0.0, %v480
  %v482 = vpop.f32.mrb[0].mxu0
  %483 = vmatprep.mubr.f32.mxu0 0.0
  %484 = vmatmul.mubr.f32.gmra.mrb[0].mxu0 %v218
  %v485 = vpop.f32.mrb[0].mxu0
  %v486 = vadd.f32 0.0, %v485
  %v487 = vpop.f32.mrb[0].mxu0
  %488 = vmatprep.mubr.f32.mxu0 0.0
  %489 = vmatmul.mubr.f32.gmra.mrb[0].mxu0 %v219
  %v490 = vpop.f32.mrb[0].mxu0
  %v491 = vadd.f32 0.0, %v490
  %v492 = vpop.f32.mrb[0].mxu0
  %493 = vmatprep.mubr.f32.mxu0 0.0
  %494 = vmatmul.mubr.f32.gmra.mrb[0].mxu0 %v220
  %v495 = vpop.f32.mrb[0].mxu0
  %v496 = vadd.f32 0.0, %v495
  %v497 = vpop.f32.mrb[0].mxu0
  %498 = vmatprep.mubr.f32.mxu0 0.0
  %499 = vmatmul.mubr.f32.gmra.mrb[0].mxu0 %v221
  %v500 = vpop.f32.mrb[0].mxu0
  %v501 = vadd.f32 0.0, %v500
  %v502 = vpop.f32.mrb[0].mxu0
  %503 = vmatprep.mubr.f32.mxu0 0.0
  %504 = vmatmul.mubr.f32.gmra.mrb[0].mxu0 %v222
  %v505 = vpop.f32.mrb[0].mxu0
  %v506 = vadd.f32 0.0, %v505
  %v507 = vpop.f32.mrb[0].mxu0
  %508 = vmatprep.mubr.f32.mxu0 0.0
  %509 = vmatmul.mubr.f32.gmra.mrb[0].mxu0 %v223
  %v510 = vpop.f32.mrb[0].mxu0
  %v511 = vadd.f32 0.0, %v510
  %v512 = vpop.f32.mrb[0].mxu0
  %513 = vdwg.mxu0
  %v514 = vmul.f32 %v291, %v436
  %v515 = vmul.f32 %v296, %v441
  %v516 = vmul.f32 %v301, %v446
  %v517 = vmul.f32 %v306, %v451
  %v518 = vmul.f32 %v311, %v456
  %v519 = vmul.f32 %v316, %v461
  %v520 = vmul.f32 %v321, %v466
  %v521 = vmul.f32 %v326, %v471
  %v522 = vmul.f32 %v331, %v476
  %v523 = vmul.f32 %v336, %v481
  %v524 = vmul.f32 %v341, %v486
  %v525 = vmul.f32 %v346, %v491
  %v526 = vmul.f32 %v351, %v496
  %v527 = vmul.f32 %v356, %v501
  %v528 = vmul.f32 %v361, %v506
  %v529 = vmul.f32 %v366, %v511
  %530 = vadd.xlane.f32.xlu0 %v514
  %v531 = vpop.xlane.xlu0 %530
  %532 = vadd.xlane.f32.xlu0 %v515
  %v533 = vpop.xlane.xlu0 %532
  %534 = vadd.xlane.f32.xlu0 %v516
  %v535 = vpop.xlane.xlu0 %534
  %536 = vadd.xlane.f32.xlu0 %v517
  %v537 = vpop.xlane.xlu0 %536
  %538 = vadd.xlane.f32.xlu0 %v518
  %v539 = vpop.xlane.xlu0 %538
  %540 = vadd.xlane.f32.xlu0 %v519
  %v541 = vpop.xlane.xlu0 %540
  %542 = vadd.xlane.f32.xlu0 %v520
  %v543 = vpop.xlane.xlu0 %542
  %544 = vadd.xlane.f32.xlu0 %v521
  %v545 = vpop.xlane.xlu0 %544
  %546 = vadd.xlane.f32.xlu0 %v522
  %v547 = vpop.xlane.xlu0 %546
  %548 = vadd.xlane.f32.xlu0 %v523
  %v549 = vpop.xlane.xlu0 %548
  %550 = vadd.xlane.f32.xlu0 %v524
  %v551 = vpop.xlane.xlu0 %550
  %552 = vadd.xlane.f32.xlu0 %v525
  %v553 = vpop.xlane.xlu0 %552
  %554 = vadd.xlane.f32.xlu0 %v526
  %v555 = vpop.xlane.xlu0 %554
  %556 = vadd.xlane.f32.xlu0 %v527
  %v557 = vpop.xlane.xlu0 %556
  %558 = vadd.xlane.f32.xlu0 %v528
  %v559 = vpop.xlane.xlu0 %558
  %560 = vadd.xlane.f32.xlu0 %v529
  %v561 = vpop.xlane.xlu0 %560
  %v562 = vsub.f32 0.0, %v531
  %v563 = vsub.f32 0.0, %v533
  %v564 = vsub.f32 0.0, %v535
  %v565 = vsub.f32 0.0, %v537
  %v566 = vsub.f32 0.0, %v539
  %v567 = vsub.f32 0.0, %v541
  %v568 = vsub.f32 0.0, %v543
  %v569 = vsub.f32 0.0, %v545
  %v570 = vsub.f32 0.0, %v547
  %v571 = vsub.f32 0.0, %v549
  %v572 = vsub.f32 0.0, %v551
  %v573 = vsub.f32 0.0, %v553
  %v574 = vsub.f32 0.0, %v555
  %v575 = vsub.f32 0.0, %v557
  %v576 = vsub.f32 0.0, %v559
  %v577 = vsub.f32 0.0, %v561
  %v578 = vxor.u32 %v562, 2147483648
  %v579 = vxor.u32 %v563, 2147483648
  %v580 = vxor.u32 %v564, 2147483648
  %v581 = vxor.u32 %v565, 2147483648
  %v582 = vxor.u32 %v566, 2147483648
  %v583 = vxor.u32 %v567, 2147483648
  %v584 = vxor.u32 %v568, 2147483648
  %v585 = vxor.u32 %v569, 2147483648
  %v586 = vxor.u32 %v570, 2147483648
  %v587 = vxor.u32 %v571, 2147483648
  %v588 = vxor.u32 %v572, 2147483648
  %v589 = vxor.u32 %v573, 2147483648
  %v590 = vxor.u32 %v574, 2147483648
  %v591 = vxor.u32 %v575, 2147483648
  %v592 = vxor.u32 %v576, 2147483648
  %v593 = vxor.u32 %v577, 2147483648
  %v594 = vmul.f32 %v578, 1.442695
  %v595 = vpow.pop %v594
  %v596 = vmul.f32 %v579, 1.442695
  %v597 = vpow.pop %v596
  %v598 = vmul.f32 %v580, 1.442695
  %v599 = vpow.pop %v598
  %v600 = vmul.f32 %v581, 1.442695
  %v601 = vpow.pop %v600
  %v602 = vmul.f32 %v582, 1.442695
  %v603 = vpow.pop %v602
  %v604 = vmul.f32 %v583, 1.442695
  %v605 = vpow.pop %v604
  %v606 = vmul.f32 %v584, 1.442695
  %v607 = vpow.pop %v606
  %v608 = vmul.f32 %v585, 1.442695
  %v609 = vpow.pop %v608
  %v610 = vmul.f32 %v586, 1.442695
  %v611 = vpow.pop %v610
  %v612 = vmul.f32 %v587, 1.442695
  %v613 = vpow.pop %v612
  %v614 = vmul.f32 %v588, 1.442695
  %v615 = vpow.pop %v614
  %v616 = vmul.f32 %v589, 1.442695
  %v617 = vpow.pop %v616
  %v618 = vmul.f32 %v590, 1.442695
  %v619 = vpow.pop %v618
  %v620 = vmul.f32 %v591, 1.442695
  %v621 = vpow.pop %v620
  %v622 = vmul.f32 %v592, 1.442695
  %v623 = vpow.pop %v622
  %v624 = vmul.f32 %v593, 1.442695
  %v625 = vpow.pop %v624
  %v626 = vadd.f32 %v595, 1.0
  %v627 = vadd.f32 %v597, 1.0
  %v628 = vadd.f32 %v599, 1.0
  %v629 = vadd.f32 %v601, 1.0
  %v630 = vadd.f32 %v603, 1.0
  %v631 = vadd.f32 %v605, 1.0
  %v632 = vadd.f32 %v607, 1.0
  %v633 = vadd.f32 %v609, 1.0
  %v634 = vadd.f32 %v611, 1.0
  %v635 = vadd.f32 %v613, 1.0
  %v636 = vadd.f32 %v615, 1.0
  %v637 = vadd.f32 %v617, 1.0
  %v638 = vadd.f32 %v619, 1.0
  %v639 = vadd.f32 %v621, 1.0
  %v640 = vadd.f32 %v623, 1.0
  %v641 = vadd.f32 %v625, 1.0
  %v642 = vrcp.pop %v626
  %v643 = vmul.f32 1.0, %v642
  %v644 = vrcp.pop %v627
  %v645 = vmul.f32 1.0, %v644
  %v646 = vrcp.pop %v628
  %v647 = vmul.f32 1.0, %v646
  %v648 = vrcp.pop %v629
  %v649 = vmul.f32 1.0, %v648
  %v650 = vrcp.pop %v630
  %v651 = vmul.f32 1.0, %v650
  %v652 = vrcp.pop %v631
  %v653 = vmul.f32 1.0, %v652
  %v654 = vrcp.pop %v632
  %v655 = vmul.f32 1.0, %v654
  %v656 = vrcp.pop %v633
  %v657 = vmul.f32 1.0, %v656
  %v658 = vrcp.pop %v634
  %v659 = vmul.f32 1.0, %v658
  %v660 = vrcp.pop %v635
  %v661 = vmul.f32 1.0, %v660
  %v662 = vrcp.pop %v636
  %v663 = vmul.f32 1.0, %v662
  %v664 = vrcp.pop %v637
  %v665 = vmul.f32 1.0, %v664
  %v666 = vrcp.pop %v638
  %v667 = vmul.f32 1.0, %v666
  %v668 = vrcp.pop %v639
  %v669 = vmul.f32 1.0, %v668
  %v670 = vrcp.pop %v640
  %v671 = vmul.f32 1.0, %v670
  %v672 = vrcp.pop %v641
  %v673 = vmul.f32 1.0, %v672
  %vm674 = vcmask 7168
  %675 = vst.msk [vmem:[%s3] sm:$0xff] %vm674, %v643
  %676 = vst.msk [vmem:[%s3 + $0x8] sm:$0xff] %vm674, %v645
  %677 = vst.msk [vmem:[%s3 + $0x10] sm:$0xff] %vm674, %v647
  %678 = vst.msk [vmem:[%s3 + $0x18] sm:$0xff] %vm674, %v649
  %679 = vst.msk [vmem:[%s3 + $0x20] sm:$0xff] %vm674, %v651
  %680 = vst.msk [vmem:[%s3 + $0x28] sm:$0xff] %vm674, %v653
  %681 = vst.msk [vmem:[%s3 + $0x30] sm:$0xff] %vm674, %v655
  %682 = vst.msk [vmem:[%s3 + $0x38] sm:$0xff] %vm674, %v657
  %683 = vst.msk [vmem:[%s3 + $0x40] sm:$0xff] %vm674, %v659
  %684 = vst.msk [vmem:[%s3 + $0x48] sm:$0xff] %vm674, %v661
  %685 = vst.msk [vmem:[%s3 + $0x50] sm:$0xff] %vm674, %v663
  %686 = vst.msk [vmem:[%s3 + $0x58] sm:$0xff] %vm674, %v665
  %687 = vst.msk [vmem:[%s3 + $0x60] sm:$0xff] %vm674, %v667
  %688 = vst.msk [vmem:[%s3 + $0x68] sm:$0xff] %vm674, %v669
  %689 = vst.msk [vmem:[%s3 + $0x70] sm:$0xff] %vm674, %v671
  %690 = vst.msk [vmem:[%s3 + $0x78] sm:$0xff] %vm674, %v673
  // Predicated region
  $region14: #{tpu_custom_call.1} parent=0 // pred_check
    _
  $region15: #{tpu_custom_call.1} parent=0 // pred_check_branch
    %692 = sbr.rel (0) target = $region17
  $region16: #{tpu_custom_call.1} parent=0 // pred_region
    _
  $region17: #{tpu_custom_call.1} parent=0 // pred_fallthru
    _
  // Predicated region
  $region18: #{tpu_custom_call.1} parent=0 // pred_check
    _
  $region19: #{tpu_custom_call.1} parent=0 // pred_check_branch
    %694 = sbr.rel (0) target = $region21
  $region20: #{tpu_custom_call.1} parent=0 // pred_region
    _
  $region21: #{tpu_custom_call.1} parent=0 // pred_fallthru
    _

</llo_original>
